<compile_context>
chip_gen: v6e
topology: v6e:2x2x1
jax: 0.10.0
libtpu: 0.0.40
codegen_flags: <defaults>
</compile_context>

<pallas_src>
import jax
import jax.numpy as jnp
from jax.experimental import pallas as pl
from jax.experimental.pallas import tpu as pltpu


# ---------------------------------------------------------------------------
# Kernel: x <- tanh(x @ W_l + b_l) for every layer, all resident in VMEM.
# ---------------------------------------------------------------------------
def _fused_mlp_kernel(x_ref, p_ref, o_ref):
    """x_ref: (B_pad, D_pad) f32-castable; p_ref: (L, D_pad + 8, D_pad) f32 slab;
    o_ref: (B_pad, D_pad).  Layer l uses p_ref[l, :D_pad, :] as weight and
    p_ref[l, D_pad, :] as bias."""
    num_layers, slab_rows, d_pad = p_ref.shape
    k = slab_rows - 8  # == d_pad: weight rows; bias lives at row k (tile-aligned slice)

    x = x_ref[...].astype(jnp.float32)
    for layer in range(num_layers):                       # static unroll (L is tiny)
        w = p_ref[layer, 0:k, :]                          # (D_pad, D_pad), aligned slice
        b = p_ref[layer, k:k + 1, :]                      # (1, D_pad), broadcasts over rows
        x = jnp.dot(x, w,
                    preferred_element_type=jnp.float32,
                    precision=jax.lax.Precision.HIGHEST)  # MXU, exact-f32 passes
        x = jnp.tanh(x + b)                               # VPU add + EUP tanh, f32 (v5e-safe)
    o_ref[...] = x.astype(o_ref.dtype)


# ---------------------------------------------------------------------------
# Init-time parameter packing: one zero-padded slab -> one DMA per forward.
# ---------------------------------------------------------------------------
def pack_actor_params(params):
    """Pack [(W: (in,out) f32, b: (out,) f32), ...] into a single zero-padded slab.

    Returns (slab, out_dim) where slab has shape (L, D_pad + 8, D_pad):
      rows [0, D_pad)  : weight, zero-padded to (D_pad, D_pad)
      row  D_pad       : bias, zero-padded to (D_pad,)
      rows D_pad+1 ..  : zero (sublane-tile padding)
    Returns (None, None) for net_arch == [] (identity policy latent).
    """
    if not params:
        return None, None
    dims = [params[0][0].shape[0]] + [w.shape[1] for (w, _) in params]
    d_pad = 128 * ((max(dims) + 127) // 128)              # lane-dense common width
    num_layers = len(params)
    slab = jnp.zeros((num_layers, d_pad + 8, d_pad), jnp.float32)
    for layer, (w, b) in enumerate(params):
        k, n = w.shape
        slab = slab.at[layer, :k, :n].set(w.astype(jnp.float32))
        slab = slab.at[layer, d_pad, :n].set(b.astype(jnp.float32))
    return slab, dims[-1]


# ---------------------------------------------------------------------------
# Forward wrapper: pad -> single no-grid pallas_call -> slice.
# ---------------------------------------------------------------------------
def mlp_build_actor_forward(features: jax.Array, slab, out_dim) -> jax.Array:
    """policy_net(features): fused [Linear -> Tanh] * L in one pallas_call."""
    if slab is None:
        # net_arch == []: linear (identity) policy latent.
        return features

    batch, feat = features.shape
    d_pad = slab.shape[2]
    b_pad = 8 * ((batch + 7) // 8)

    # Zero-pad to whole (8, 128) tiles; zeros keep padded lanes exactly zero in-kernel.
    x = jnp.pad(features, ((0, b_pad - batch), (0, d_pad - feat)))

    vmem = pl.BlockSpec(memory_space=pltpu.MemorySpace.VMEM)
    out = pl.pallas_call(
        _fused_mlp_kernel,
        out_shape=jax.ShapeDtypeStruct((b_pad, d_pad), features.dtype),
        in_specs=[vmem, vmem],
        out_specs=vmem,
    )(x, slab)
    return out[:batch, :out_dim]


# ---------------------------------------------------------------------------
# Parameter init + plain-JAX reference.
# ---------------------------------------------------------------------------
def init_mlp_params(key, feature_actor_dim, net_arch, dtype=jnp.float32):
    """Deterministic init mimicking nn.Linear default (uniform +/- 1/sqrt(fan_in)).
    Weights stored transposed as (in_dim, out_dim) so y = x @ W + b."""
    params = []
    last = feature_actor_dim
    for out_dim in net_arch:
        key, kw, kb = jax.random.split(key, 3)
        bound = 1.0 / (last ** 0.5)
        w = jax.random.uniform(kw, (last, out_dim), dtype, -bound, bound)
        b = jax.random.uniform(kb, (out_dim,), dtype, -bound, bound)
        params.append((w, b))
        last = out_dim
    return params


def mlp_build_actor_ref(features: jax.Array, params) -> jax.Array:
    x = features
    for (w, b) in params:
        x = jnp.tanh(x @ w + b)
    return x


if __name__ == "__main__":
    # Module config: feature_actor_dim=32, net_arch=[64, 64], activation_fn=nn.Tanh
    batch = 2
    feature_actor_dim = 32
    net_arch = [64, 64]

    key = jax.random.PRNGKey(0)
    key, kx = jax.random.split(key)
    features = jax.random.normal(kx, (batch, feature_actor_dim), jnp.float32)
    params = init_mlp_params(key, feature_actor_dim, net_arch)

    # Pack once at "init time" (single parameter operand -> single weight DMA per call).
    slab, out_dim = pack_actor_params(params)

    out = mlp_build_actor_forward(features, slab, out_dim)
    out = jax.block_until_ready(out)

    ref = mlp_build_actor_ref(features, params)
    assert out.shape == (batch, net_arch[-1]), out.shape
    assert jnp.allclose(out, ref, atol=1e-5, rtol=1e-5), "mismatch vs reference"

    print("KERNEL_OK")
</pallas_src>

<mosaic_0001>
module attributes {stable_mosaic.version = 11 : i64} {
  func.func @_fused_mlp_kernel(%arg0: memref<8x128xf32, #tpu.memory_space<vmem>>, %arg1: memref<2x136x128xf32, #tpu.memory_space<vmem>>, %arg2: memref<8x128xf32, #tpu.memory_space<vmem>>) attributes {dimension_semantics = [], scalar_prefetch = 0 : i64, scratch_operands = 0 : i64, tpu.core_type = #tpu.core_type<tc>} {
    %c0 = arith.constant 0 : index
    %c0_0 = arith.constant 0 : index
    %0 = vector.load %arg0[%c0, %c0_0] : memref<8x128xf32, #tpu.memory_space<vmem>>, vector<8x128xf32>
    %c0_1 = arith.constant 0 : index
    %c0_2 = arith.constant 0 : index
    %c0_3 = arith.constant 0 : index
    %1 = vector.load %arg1[%c0_1, %c0_2, %c0_3] : memref<2x136x128xf32, #tpu.memory_space<vmem>>, vector<1x128x128xf32>
    %2 = vector.shape_cast %1 : vector<1x128x128xf32> to vector<128x128xf32>
    %c0_4 = arith.constant 0 : index
    %c128 = arith.constant 128 : index
    %c0_5 = arith.constant 0 : index
    %3 = vector.load %arg1[%c0_4, %c128, %c0_5] : memref<2x136x128xf32, #tpu.memory_space<vmem>>, vector<1x1x128xf32>
    %4 = vector.shape_cast %3 : vector<1x1x128xf32> to vector<1x128xf32>
    %cst = arith.constant dense<0.000000e+00> : vector<8x128xf32>
    %5 = tpu.matmul %0, %2, %cst {dimension_numbers = #tpu.dot_dimension_numbers<[1], [0], [0], [1], [0, 0, 1, 1], [], []>, precision = #tpu.contract_precision<fp32>} : vector<8x128xf32>, vector<128x128xf32>, vector<8x128xf32> -> vector<8x128xf32>
    %6 = vector.broadcast %4 : vector<1x128xf32> to vector<8x128xf32>
    %7 = arith.addf %5, %6 : vector<8x128xf32>
    %8 = math.tanh %7 : vector<8x128xf32>
    %c1 = arith.constant 1 : index
    %c0_6 = arith.constant 0 : index
    %c0_7 = arith.constant 0 : index
    %9 = vector.load %arg1[%c1, %c0_6, %c0_7] : memref<2x136x128xf32, #tpu.memory_space<vmem>>, vector<1x128x128xf32>
    %10 = vector.shape_cast %9 : vector<1x128x128xf32> to vector<128x128xf32>
    %c1_8 = arith.constant 1 : index
    %c128_9 = arith.constant 128 : index
    %c0_10 = arith.constant 0 : index
    %11 = vector.load %arg1[%c1_8, %c128_9, %c0_10] : memref<2x136x128xf32, #tpu.memory_space<vmem>>, vector<1x1x128xf32>
    %12 = vector.shape_cast %11 : vector<1x1x128xf32> to vector<1x128xf32>
    %cst_11 = arith.constant dense<0.000000e+00> : vector<8x128xf32>
    %13 = tpu.matmul %8, %10, %cst_11 {dimension_numbers = #tpu.dot_dimension_numbers<[1], [0], [0], [1], [0, 0, 1, 1], [], []>, precision = #tpu.contract_precision<fp32>} : vector<8x128xf32>, vector<128x128xf32>, vector<8x128xf32> -> vector<8x128xf32>
    %14 = vector.broadcast %12 : vector<1x128xf32> to vector<8x128xf32>
    %15 = arith.addf %13, %14 : vector<8x128xf32>
    %16 = math.tanh %15 : vector<8x128xf32>
    %c0_12 = arith.constant 0 : index
    %c0_13 = arith.constant 0 : index
    %17 = vector.load %arg2[%c0_12, %c0_13] : memref<8x128xf32, #tpu.memory_space<vmem>>, vector<8x128xf32>
    tpu.vector_store %arg2[%c0_12, %c0_13], %16 {strides = array<i32>} : memref<8x128xf32, #tpu.memory_space<vmem>>, vector<8x128xf32>,
    return
  }
}

</mosaic_0001>

<llo_original>
// kernel: tpu_custom_call.1
$region0: #{tpu_custom_call.1}
  #allocation0 [shape = 'u32[]', space=smem, size = 0x4, offset = 0x4, fixed_abs, tag = 'smem constant byte address 0x4 - core index']
  #allocation1 [shape = 'u32[144,128]{1,0:T(1,128)}', space=vmem, size = 0x12000, scoped, tag = 'internal scratch']
  %s0 = inlined_call_operand.hbm [shape: f32[8,128], index: 0, kind: input, shape index: {}]
  %s1 = inlined_call_operand.hbm [shape: f32[2,136,128], index: 1, kind: input, shape index: {}]
  %s2 = inlined_call_operand.hbm [shape: f32[8,128], index: 2, kind: output, shape index: {}]
  %s3 = sld [smem:[#allocation0]]
  $region26: #{tpu_custom_call.1} parent=0
    _
  %s5 = ssub.s32 1, %s3
  %s6 = scalar_select 0, %s5, %s3
  $region1: #{tpu_custom_call.1} parent=0
    #allocation2 [shape = 'u8[4096]{0}', space=vmem, size = 0x1000, scoped, tag = 'input window, operand 0, single buffered']
    #allocation3 [shape = 's32[1]{0}', space=sflag, size = 0x4, scoped, tag = 'scoped memory for tpu_custom_call.1']
    #allocation4 [shape = 's32[1]{0}', space=sflag, size = 0x4, scoped, tag = 'scoped memory for tpu_custom_call.1']
    #allocation5 [shape = 'u8[139264]{0}', space=vmem, size = 0x22000, scoped, tag = 'input window, operand 1, single buffered']
    #allocation6 [shape = 's32[1]{0}', space=sflag, size = 0x4, scoped, tag = 'scoped memory for tpu_custom_call.1']
    #allocation7 [shape = 'u8[4096]{0}', space=vmem, size = 0x1000, scoped, tag = 'output window, operand 0, single buffered']
    %7 = vsyncpa [#allocation3], 0
    %8 = vsyncpa [#allocation6], 0
    %9 = vsyncpa [#allocation4], 0
    // Predicated region
    $region2: #{tpu_custom_call.1} parent=1 // pred_check
      _
    $region3: #{tpu_custom_call.1} parent=1 // pred_check_branch
      %11 = sbr.rel (0) target = $region5
    $region4: #{tpu_custom_call.1} parent=1 // pred_region
      %s13 = ssub.s32 128, 128
      %14 = vsyncadd [#allocation3], %s13
      %s16 = sshll.u32 [#allocation2], 4
      %s17 = int_to_ptr.vmem [resolvable:$true] %s16
      %19 = dma.hbm_to_vmem [thread:$0]  %s0, 128, %s17, [#allocation3]
    $region5: #{tpu_custom_call.1} parent=1 // pred_fallthru
      _
    // Predicated region
    $region6: #{tpu_custom_call.1} parent=1 // pred_check
      _
    $region7: #{tpu_custom_call.1} parent=1 // pred_check_branch
      %21 = sbr.rel (0) target = $region9
    $region8: #{tpu_custom_call.1} parent=1 // pred_region
      %s23 = ssub.s32 4352, 4352
      %24 = vsyncadd [#allocation6], %s23
      %s25 = sshll.u32 [#allocation5], 4
      %s26 = int_to_ptr.vmem [resolvable:$true] %s25
      %31 = dma.hbm_to_vmem [thread:$0]  %s1, 4352, %s26, [#allocation6], 128, 128, 8
    $region9: #{tpu_custom_call.1} parent=1 // pred_fallthru
      _
    // Predicated region
    $region10: #{tpu_custom_call.1} parent=1 // pred_check
      _
    $region11: #{tpu_custom_call.1} parent=1 // pred_check_branch
      %33 = sbr.rel (0) target = $region13
    $region12: #{tpu_custom_call.1} parent=1 // pred_region
      %34 = dma.done [#allocation3], 128
    $region13: #{tpu_custom_call.1} parent=1 // pred_fallthru
      _
    // Predicated region
    $region14: #{tpu_custom_call.1} parent=1 // pred_check
      _
    $region15: #{tpu_custom_call.1} parent=1 // pred_check_branch
      %36 = sbr.rel (0) target = $region17
    $region16: #{tpu_custom_call.1} parent=1 // pred_region
      %37 = dma.done [#allocation6], 4352
    $region17: #{tpu_custom_call.1} parent=1 // pred_fallthru
      _
    %v38 = vld [vmem:[#allocation2] sm:$0xff]
    %v39 = vld [vmem:[#allocation5] sm:$0xff]
    %v40 = vld [vmem:[#allocation5 + $0x8] sm:$0xff]
    %v41 = vld [vmem:[#allocation5 + $0x10] sm:$0xff]
    %v42 = vld [vmem:[#allocation5 + $0x18] sm:$0xff]
    %v43 = vld [vmem:[#allocation5 + $0x20] sm:$0xff]
    %v44 = vld [vmem:[#allocation5 + $0x28] sm:$0xff]
    %v45 = vld [vmem:[#allocation5 + $0x30] sm:$0xff]
    %v46 = vld [vmem:[#allocation5 + $0x38] sm:$0xff]
    %v47 = vld [vmem:[#allocation5 + $0x40] sm:$0xff]
    %v48 = vld [vmem:[#allocation5 + $0x48] sm:$0xff]
    %v49 = vld [vmem:[#allocation5 + $0x50] sm:$0xff]
    %v50 = vld [vmem:[#allocation5 + $0x58] sm:$0xff]
    %v51 = vld [vmem:[#allocation5 + $0x60] sm:$0xff]
    %v52 = vld [vmem:[#allocation5 + $0x68] sm:$0xff]
    %v53 = vld [vmem:[#allocation5 + $0x70] sm:$0xff]
    %v54 = vld [vmem:[#allocation5 + $0x78] sm:$0xff]
    %v55 = vld [vmem:[#allocation5 + $0x80] sm:$0x1]
    %v56 = vlaneseq
    %v57 = vshrl.u32 %v56, 7
    %v58 = vsub.s32 0, %v57
    %v59 = vrot.slane %v55, %v58
    %60 = vmatprep.subr.mxu0 0.0
    %v61 = vand.u32 %v54, 4294901760
    %62 = vmatpush1.msra.mxu0 %v61
    %63 = vmatprep.subr.mxu0 0.0
    %v64 = vand.u32 %v53, 4294901760
    %65 = vmatpush1.msra.mxu0 %v64
    %66 = vmatprep.subr.mxu0 0.0
    %v67 = vand.u32 %v52, 4294901760
    %68 = vmatpush1.msra.mxu0 %v67
    %69 = vmatprep.subr.mxu0 0.0
    %v70 = vand.u32 %v51, 4294901760
    %71 = vmatpush1.msra.mxu0 %v70
    %72 = vmatprep.subr.mxu0 0.0
    %v73 = vand.u32 %v50, 4294901760
    %74 = vmatpush1.msra.mxu0 %v73
    %75 = vmatprep.subr.mxu0 0.0
    %v76 = vand.u32 %v49, 4294901760
    %77 = vmatpush1.msra.mxu0 %v76
    %78 = vmatprep.subr.mxu0 0.0
    %v79 = vand.u32 %v48, 4294901760
    %80 = vmatpush1.msra.mxu0 %v79
    %81 = vmatprep.subr.mxu0 0.0
    %v82 = vand.u32 %v47, 4294901760
    %83 = vmatpush1.msra.mxu0 %v82
    %84 = vmatprep.subr.mxu0 0.0
    %v85 = vand.u32 %v46, 4294901760
    %86 = vmatpush1.msra.mxu0 %v85
    %87 = vmatprep.subr.mxu0 0.0
    %v88 = vand.u32 %v45, 4294901760
    %89 = vmatpush1.msra.mxu0 %v88
    %90 = vmatprep.subr.mxu0 0.0
    %v91 = vand.u32 %v44, 4294901760
    %92 = vmatpush1.msra.mxu0 %v91
    %93 = vmatprep.subr.mxu0 0.0
    %v94 = vand.u32 %v43, 4294901760
    %95 = vmatpush1.msra.mxu0 %v94
    %96 = vmatprep.subr.mxu0 0.0
    %v97 = vand.u32 %v42, 4294901760
    %98 = vmatpush1.msra.mxu0 %v97
    %99 = vmatprep.subr.mxu0 0.0
    %v100 = vand.u32 %v41, 4294901760
    %101 = vmatpush1.msra.mxu0 %v100
    %102 = vmatprep.subr.mxu0 0.0
    %v103 = vand.u32 %v40, 4294901760
    %104 = vmatpush1.msra.mxu0 %v103
    %105 = vmatprep.subr.mxu0 0.0
    %v106 = vand.u32 %v39, 4294901760
    %107 = vmatpush1.msra.mxu0 %v106
    %108 = vmatprep.subr.mxu0 0.0
    %109 = vmatpush2.msra.mxu0 0.0
    %110 = vmatprep.subr.mxu0 0.0
    %111 = vmatpush2.msra.mxu0 0.0
    %112 = vmatprep.subr.mxu0 0.0
    %113 = vmatpush2.msra.mxu0 0.0
    %114 = vmatprep.subr.mxu0 0.0
    %115 = vmatpush2.msra.mxu0 0.0
    %116 = vmatprep.subr.mxu0 0.0
    %117 = vmatpush2.msra.mxu0 0.0
    %118 = vmatprep.subr.mxu0 0.0
    %119 = vmatpush2.msra.mxu0 0.0
    %120 = vmatprep.subr.mxu0 0.0
    %121 = vmatpush2.msra.mxu0 0.0
    %122 = vmatprep.subr.mxu0 0.0
    %123 = vmatpush2.msra.mxu0 0.0
    %124 = vmatprep.subr.mxu0 0.0
    %125 = vmatpush2.msra.mxu0 0.0
    %126 = vmatprep.subr.mxu0 0.0
    %127 = vmatpush2.msra.mxu0 0.0
    %128 = vmatprep.subr.mxu0 0.0
    %129 = vmatpush2.msra.mxu0 0.0
    %130 = vmatprep.subr.mxu0 0.0
    %131 = vmatpush2.msra.mxu0 0.0
    %132 = vmatprep.subr.mxu0 0.0
    %133 = vmatpush2.msra.mxu0 0.0
    %134 = vmatprep.subr.mxu0 0.0
    %135 = vmatpush2.msra.mxu0 0.0
    %136 = vmatprep.subr.mxu0 0.0
    %137 = vmatpush2.msra.mxu0 0.0
    %138 = vmatprep.subr.mxu0 0.0
    %139 = vmatpush2.msra.mxu0 0.0
    %140 = vmatprep.mubr.f32.mxu0 0.0
    %v141 = vand.u32 %v38, 4294901760
    %v142 = vsub.f32 %v38, %v141
    %v143 = vand.u32 %v142, 4294901760
    %v144 = vsub.f32 %v142, %v143
    %v145 = vand.u32 %v144, 4294901760
    %146 = vmatmul.mubr.f32.gmra.mxu0 %v145
    %v147 = vpop.f32.mrf.mxu0
    %v148 = vadd.f32 %v59, %v147
    %v149 = vpop.f32.mrf.mxu0
    %150 = vdwg.mxu0
    %151 = vmatprep.subr.mxu0 0.0
    %v152 = vand.u32 %v54, 4294901760
    %v153 = vsub.f32 %v54, %v152
    %v154 = vand.u32 %v153, 4294901760
    %v155 = vsub.f32 %v153, %v154
    %v156 = vand.u32 %v155, 4294901760
    %157 = vmatpush1.msra.mxu0 %v156
    %158 = vmatprep.subr.mxu0 0.0
    %v159 = vand.u32 %v53, 4294901760
    %v160 = vsub.f32 %v53, %v159
    %v161 = vand.u32 %v160, 4294901760
    %v162 = vsub.f32 %v160, %v161
    %v163 = vand.u32 %v162, 4294901760
    %164 = vmatpush1.msra.mxu0 %v163
    %165 = vmatprep.subr.mxu0 0.0
    %v166 = vand.u32 %v52, 4294901760
    %v167 = vsub.f32 %v52, %v166
    %v168 = vand.u32 %v167, 4294901760
    %v169 = vsub.f32 %v167, %v168
    %v170 = vand.u32 %v169, 4294901760
    %171 = vmatpush1.msra.mxu0 %v170
    %172 = vmatprep.subr.mxu0 0.0
    %v173 = vand.u32 %v51, 4294901760
    %v174 = vsub.f32 %v51, %v173
    %v175 = vand.u32 %v174, 4294901760
    %v176 = vsub.f32 %v174, %v175
    %v177 = vand.u32 %v176, 4294901760
    %178 = vmatpush1.msra.mxu0 %v177
    %179 = vmatprep.subr.mxu0 0.0
    %v180 = vand.u32 %v50, 4294901760
    %v181 = vsub.f32 %v50, %v180
    %v182 = vand.u32 %v181, 4294901760
    %v183 = vsub.f32 %v181, %v182
    %v184 = vand.u32 %v183, 4294901760
    %185 = vmatpush1.msra.mxu0 %v184
    %186 = vmatprep.subr.mxu0 0.0
    %v187 = vand.u32 %v49, 4294901760
    %v188 = vsub.f32 %v49, %v187
    %v189 = vand.u32 %v188, 4294901760
    %v190 = vsub.f32 %v188, %v189
    %v191 = vand.u32 %v190, 4294901760
    %192 = vmatpush1.msra.mxu0 %v191
    %193 = vmatprep.subr.mxu0 0.0
    %v194 = vand.u32 %v48, 4294901760
    %v195 = vsub.f32 %v48, %v194
    %v196 = vand.u32 %v195, 4294901760
    %v197 = vsub.f32 %v195, %v196
    %v198 = vand.u32 %v197, 4294901760
    %199 = vmatpush1.msra.mxu0 %v198
    %200 = vmatprep.subr.mxu0 0.0
    %v201 = vand.u32 %v47, 4294901760
    %v202 = vsub.f32 %v47, %v201
    %v203 = vand.u32 %v202, 4294901760
    %v204 = vsub.f32 %v202, %v203
    %v205 = vand.u32 %v204, 4294901760
    %206 = vmatpush1.msra.mxu0 %v205
    %207 = vmatprep.subr.mxu0 0.0
    %v208 = vand.u32 %v46, 4294901760
    %v209 = vsub.f32 %v46, %v208
    %v210 = vand.u32 %v209, 4294901760
    %v211 = vsub.f32 %v209, %v210
    %v212 = vand.u32 %v211, 4294901760
    %213 = vmatpush1.msra.mxu0 %v212
    %214 = vmatprep.subr.mxu0 0.0
    %v215 = vand.u32 %v45, 4294901760
    %v216 = vsub.f32 %v45, %v215
    %v217 = vand.u32 %v216, 4294901760
    %v218 = vsub.f32 %v216, %v217
    %v219 = vand.u32 %v218, 4294901760
    %220 = vmatpush1.msra.mxu0 %v219
    %221 = vmatprep.subr.mxu0 0.0
    %v222 = vand.u32 %v44, 4294901760
    %v223 = vsub.f32 %v44, %v222
    %v224 = vand.u32 %v223, 4294901760
    %v225 = vsub.f32 %v223, %v224
    %v226 = vand.u32 %v225, 4294901760
    %227 = vmatpush1.msra.mxu0 %v226
    %228 = vmatprep.subr.mxu0 0.0
    %v229 = vand.u32 %v43, 4294901760
    %v230 = vsub.f32 %v43, %v229
    %v231 = vand.u32 %v230, 4294901760
    %v232 = vsub.f32 %v230, %v231
    %v233 = vand.u32 %v232, 4294901760
    %234 = vmatpush1.msra.mxu0 %v233
    %235 = vmatprep.subr.mxu0 0.0
    %v236 = vand.u32 %v42, 4294901760
    %v237 = vsub.f32 %v42, %v236
    %v238 = vand.u32 %v237, 4294901760
    %v239 = vsub.f32 %v237, %v238
    %v240 = vand.u32 %v239, 4294901760
    %241 = vmatpush1.msra.mxu0 %v240
    %242 = vmatprep.subr.mxu0 0.0
    %v243 = vand.u32 %v41, 4294901760
    %v244 = vsub.f32 %v41, %v243
    %v245 = vand.u32 %v244, 4294901760
    %v246 = vsub.f32 %v244, %v245
    %v247 = vand.u32 %v246, 4294901760
    %248 = vmatpush1.msra.mxu0 %v247
    %249 = vmatprep.subr.mxu0 0.0
    %v250 = vand.u32 %v40, 4294901760
    %v251 = vsub.f32 %v40, %v250
    %v252 = vand.u32 %v251, 4294901760
    %v253 = vsub.f32 %v251, %v252
    %v254 = vand.u32 %v253, 4294901760
    %255 = vmatpush1.msra.mxu0 %v254
    %256 = vmatprep.subr.mxu0 0.0
    %v257 = vand.u32 %v39, 4294901760
    %v258 = vsub.f32 %v39, %v257
    %v259 = vand.u32 %v258, 4294901760
    %v260 = vsub.f32 %v258, %v259
    %v261 = vand.u32 %v260, 4294901760
    %262 = vmatpush1.msra.mxu0 %v261
    %263 = vmatprep.subr.mxu0 0.0
    %264 = vmatpush2.msra.mxu0 0.0
    %265 = vmatprep.subr.mxu0 0.0
    %266 = vmatpush2.msra.mxu0 0.0
    %267 = vmatprep.subr.mxu0 0.0
    %268 = vmatpush2.msra.mxu0 0.0
    %269 = vmatprep.subr.mxu0 0.0
    %270 = vmatpush2.msra.mxu0 0.0
    %271 = vmatprep.subr.mxu0 0.0
    %272 = vmatpush2.msra.mxu0 0.0
    %273 = vmatprep.subr.mxu0 0.0
    %274 = vmatpush2.msra.mxu0 0.0
    %275 = vmatprep.subr.mxu0 0.0
    %276 = vmatpush2.msra.mxu0 0.0
    %277 = vmatprep.subr.mxu0 0.0
    %278 = vmatpush2.msra.mxu0 0.0
    %279 = vmatprep.subr.mxu0 0.0
    %280 = vmatpush2.msra.mxu0 0.0
    %281 = vmatprep.subr.mxu0 0.0
    %282 = vmatpush2.msra.mxu0 0.0
    %283 = vmatprep.subr.mxu0 0.0
    %284 = vmatpush2.msra.mxu0 0.0
    %285 = vmatprep.subr.mxu0 0.0
    %286 = vmatpush2.msra.mxu0 0.0
    %287 = vmatprep.subr.mxu0 0.0
    %288 = vmatpush2.msra.mxu0 0.0
    %289 = vmatprep.subr.mxu0 0.0
    %290 = vmatpush2.msra.mxu0 0.0
    %291 = vmatprep.subr.mxu0 0.0
    %292 = vmatpush2.msra.mxu0 0.0
    %293 = vmatprep.subr.mxu0 0.0
    %294 = vmatpush2.msra.mxu0 0.0
    %295 = vmatprep.mubr.f32.mxu0 0.0
    %v296 = vand.u32 %v38, 4294901760
    %297 = vmatmul.mubr.f32.gmra.mxu0 %v296
    %v298 = vpop.f32.mrf.mxu0
    %v299 = vadd.f32 %v148, %v298
    %v300 = vpop.f32.mrf.mxu0
    %301 = vdwg.mxu0
    %302 = vmatprep.subr.mxu0 0.0
    %v303 = vand.u32 %v54, 4294901760
    %v304 = vsub.f32 %v54, %v303
    %305 = vmatpush1.msra.mxu0 %v304
    %306 = vmatprep.subr.mxu0 0.0
    %v307 = vand.u32 %v53, 4294901760
    %v308 = vsub.f32 %v53, %v307
    %309 = vmatpush1.msra.mxu0 %v308
    %310 = vmatprep.subr.mxu0 0.0
    %v311 = vand.u32 %v52, 4294901760
    %v312 = vsub.f32 %v52, %v311
    %313 = vmatpush1.msra.mxu0 %v312
    %314 = vmatprep.subr.mxu0 0.0
    %v315 = vand.u32 %v51, 4294901760
    %v316 = vsub.f32 %v51, %v315
    %317 = vmatpush1.msra.mxu0 %v316
    %318 = vmatprep.subr.mxu0 0.0
    %v319 = vand.u32 %v50, 4294901760
    %v320 = vsub.f32 %v50, %v319
    %321 = vmatpush1.msra.mxu0 %v320
    %322 = vmatprep.subr.mxu0 0.0
    %v323 = vand.u32 %v49, 4294901760
    %v324 = vsub.f32 %v49, %v323
    %325 = vmatpush1.msra.mxu0 %v324
    %326 = vmatprep.subr.mxu0 0.0
    %v327 = vand.u32 %v48, 4294901760
    %v328 = vsub.f32 %v48, %v327
    %329 = vmatpush1.msra.mxu0 %v328
    %330 = vmatprep.subr.mxu0 0.0
    %v331 = vand.u32 %v47, 4294901760
    %v332 = vsub.f32 %v47, %v331
    %333 = vmatpush1.msra.mxu0 %v332
    %334 = vmatprep.subr.mxu0 0.0
    %v335 = vand.u32 %v46, 4294901760
    %v336 = vsub.f32 %v46, %v335
    %337 = vmatpush1.msra.mxu0 %v336
    %338 = vmatprep.subr.mxu0 0.0
    %v339 = vand.u32 %v45, 4294901760
    %v340 = vsub.f32 %v45, %v339
    %341 = vmatpush1.msra.mxu0 %v340
    %342 = vmatprep.subr.mxu0 0.0
    %v343 = vand.u32 %v44, 4294901760
    %v344 = vsub.f32 %v44, %v343
    %345 = vmatpush1.msra.mxu0 %v344
    %346 = vmatprep.subr.mxu0 0.0
    %v347 = vand.u32 %v43, 4294901760
    %v348 = vsub.f32 %v43, %v347
    %349 = vmatpush1.msra.mxu0 %v348
    %350 = vmatprep.subr.mxu0 0.0
    %v351 = vand.u32 %v42, 4294901760
    %v352 = vsub.f32 %v42, %v351
    %353 = vmatpush1.msra.mxu0 %v352
    %354 = vmatprep.subr.mxu0 0.0
    %v355 = vand.u32 %v41, 4294901760
    %v356 = vsub.f32 %v41, %v355
    %357 = vmatpush1.msra.mxu0 %v356
    %358 = vmatprep.subr.mxu0 0.0
    %v359 = vand.u32 %v40, 4294901760
    %v360 = vsub.f32 %v40, %v359
    %361 = vmatpush1.msra.mxu0 %v360
    %362 = vmatprep.subr.mxu0 0.0
    %v363 = vand.u32 %v39, 4294901760
    %v364 = vsub.f32 %v39, %v363
    %365 = vmatpush1.msra.mxu0 %v364
    %366 = vmatprep.subr.mxu0 0.0
    %367 = vmatpush2.msra.mxu0 0.0
    %368 = vmatprep.subr.mxu0 0.0
    %369 = vmatpush2.msra.mxu0 0.0
    %370 = vmatprep.subr.mxu0 0.0
    %371 = vmatpush2.msra.mxu0 0.0
    %372 = vmatprep.subr.mxu0 0.0
    %373 = vmatpush2.msra.mxu0 0.0
    %374 = vmatprep.subr.mxu0 0.0
    %375 = vmatpush2.msra.mxu0 0.0
    %376 = vmatprep.subr.mxu0 0.0
    %377 = vmatpush2.msra.mxu0 0.0
    %378 = vmatprep.subr.mxu0 0.0
    %379 = vmatpush2.msra.mxu0 0.0
    %380 = vmatprep.subr.mxu0 0.0
    %381 = vmatpush2.msra.mxu0 0.0
    %382 = vmatprep.subr.mxu0 0.0
    %383 = vmatpush2.msra.mxu0 0.0
    %384 = vmatprep.subr.mxu0 0.0
    %385 = vmatpush2.msra.mxu0 0.0
    %386 = vmatprep.subr.mxu0 0.0
    %387 = vmatpush2.msra.mxu0 0.0
    %388 = vmatprep.subr.mxu0 0.0
    %389 = vmatpush2.msra.mxu0 0.0
    %390 = vmatprep.subr.mxu0 0.0
    %391 = vmatpush2.msra.mxu0 0.0
    %392 = vmatprep.subr.mxu0 0.0
    %393 = vmatpush2.msra.mxu0 0.0
    %394 = vmatprep.subr.mxu0 0.0
    %395 = vmatpush2.msra.mxu0 0.0
    %396 = vmatprep.subr.mxu0 0.0
    %397 = vmatpush2.msra.mxu0 0.0
    %398 = vmatprep.mubr.f32.mxu0 0.0
    %v399 = vand.u32 %v38, 4294901760
    %v400 = vsub.f32 %v38, %v399
    %401 = vmatmul.mubr.f32.gmra.mxu0 %v400
    %v402 = vpop.f32.mrf.mxu0
    %v403 = vadd.f32 %v299, %v402
    %v404 = vpop.f32.mrf.mxu0
    %405 = vdwg.mxu0
    %406 = vmatprep.subr.mxu0 0.0
    %v407 = vand.u32 %v54, 4294901760
    %408 = vmatpush1.msra.mxu0 %v407
    %409 = vmatprep.subr.mxu0 0.0
    %v410 = vand.u32 %v53, 4294901760
    %411 = vmatpush1.msra.mxu0 %v410
    %412 = vmatprep.subr.mxu0 0.0
    %v413 = vand.u32 %v52, 4294901760
    %414 = vmatpush1.msra.mxu0 %v413
    %415 = vmatprep.subr.mxu0 0.0
    %v416 = vand.u32 %v51, 4294901760
    %417 = vmatpush1.msra.mxu0 %v416
    %418 = vmatprep.subr.mxu0 0.0
    %v419 = vand.u32 %v50, 4294901760
    %420 = vmatpush1.msra.mxu0 %v419
    %421 = vmatprep.subr.mxu0 0.0
    %v422 = vand.u32 %v49, 4294901760
    %423 = vmatpush1.msra.mxu0 %v422
    %424 = vmatprep.subr.mxu0 0.0
    %v425 = vand.u32 %v48, 4294901760
    %426 = vmatpush1.msra.mxu0 %v425
    %427 = vmatprep.subr.mxu0 0.0
    %v428 = vand.u32 %v47, 4294901760
    %429 = vmatpush1.msra.mxu0 %v428
    %430 = vmatprep.subr.mxu0 0.0
    %v431 = vand.u32 %v46, 4294901760
    %432 = vmatpush1.msra.mxu0 %v431
    %433 = vmatprep.subr.mxu0 0.0
    %v434 = vand.u32 %v45, 4294901760
    %435 = vmatpush1.msra.mxu0 %v434
    %436 = vmatprep.subr.mxu0 0.0
    %v437 = vand.u32 %v44, 4294901760
    %438 = vmatpush1.msra.mxu0 %v437
    %439 = vmatprep.subr.mxu0 0.0
    %v440 = vand.u32 %v43, 4294901760
    %441 = vmatpush1.msra.mxu0 %v440
    %442 = vmatprep.subr.mxu0 0.0
    %v443 = vand.u32 %v42, 4294901760
    %444 = vmatpush1.msra.mxu0 %v443
    %445 = vmatprep.subr.mxu0 0.0
    %v446 = vand.u32 %v41, 4294901760
    %447 = vmatpush1.msra.mxu0 %v446
    %448 = vmatprep.subr.mxu0 0.0
    %v449 = vand.u32 %v40, 4294901760
    %450 = vmatpush1.msra.mxu0 %v449
    %451 = vmatprep.subr.mxu0 0.0
    %v452 = vand.u32 %v39, 4294901760
    %453 = vmatpush1.msra.mxu0 %v452
    %454 = vmatprep.subr.mxu0 0.0
    %455 = vmatpush2.msra.mxu0 0.0
    %456 = vmatprep.subr.mxu0 0.0
    %457 = vmatpush2.msra.mxu0 0.0
    %458 = vmatprep.subr.mxu0 0.0
    %459 = vmatpush2.msra.mxu0 0.0
    %460 = vmatprep.subr.mxu0 0.0
    %461 = vmatpush2.msra.mxu0 0.0
    %462 = vmatprep.subr.mxu0 0.0
    %463 = vmatpush2.msra.mxu0 0.0
    %464 = vmatprep.subr.mxu0 0.0
    %465 = vmatpush2.msra.mxu0 0.0
    %466 = vmatprep.subr.mxu0 0.0
    %467 = vmatpush2.msra.mxu0 0.0
    %468 = vmatprep.subr.mxu0 0.0
    %469 = vmatpush2.msra.mxu0 0.0
    %470 = vmatprep.subr.mxu0 0.0
    %471 = vmatpush2.msra.mxu0 0.0
    %472 = vmatprep.subr.mxu0 0.0
    %473 = vmatpush2.msra.mxu0 0.0
    %474 = vmatprep.subr.mxu0 0.0
    %475 = vmatpush2.msra.mxu0 0.0
    %476 = vmatprep.subr.mxu0 0.0
    %477 = vmatpush2.msra.mxu0 0.0
    %478 = vmatprep.subr.mxu0 0.0
    %479 = vmatpush2.msra.mxu0 0.0
    %480 = vmatprep.subr.mxu0 0.0
    %481 = vmatpush2.msra.mxu0 0.0
    %482 = vmatprep.subr.mxu0 0.0
    %483 = vmatpush2.msra.mxu0 0.0
    %484 = vmatprep.subr.mxu0 0.0
    %485 = vmatpush2.msra.mxu0 0.0
    %486 = vmatprep.mubr.f32.mxu0 0.0
    %v487 = vand.u32 %v38, 4294901760
    %v488 = vsub.f32 %v38, %v487
    %v489 = vand.u32 %v488, 4294901760
    %490 = vmatmul.mubr.f32.gmra.mxu0 %v489
    %v491 = vpop.f32.mrf.mxu0
    %v492 = vadd.f32 %v403, %v491
    %v493 = vpop.f32.mrf.mxu0
    %494 = vdwg.mxu0
    %495 = vmatprep.subr.mxu0 0.0
    %v496 = vand.u32 %v54, 4294901760
    %v497 = vsub.f32 %v54, %v496
    %v498 = vand.u32 %v497, 4294901760
    %499 = vmatpush1.msra.mxu0 %v498
    %500 = vmatprep.subr.mxu0 0.0
    %v501 = vand.u32 %v53, 4294901760
    %v502 = vsub.f32 %v53, %v501
    %v503 = vand.u32 %v502, 4294901760
    %504 = vmatpush1.msra.mxu0 %v503
    %505 = vmatprep.subr.mxu0 0.0
    %v506 = vand.u32 %v52, 4294901760
    %v507 = vsub.f32 %v52, %v506
    %v508 = vand.u32 %v507, 4294901760
    %509 = vmatpush1.msra.mxu0 %v508
    %510 = vmatprep.subr.mxu0 0.0
    %v511 = vand.u32 %v51, 4294901760
    %v512 = vsub.f32 %v51, %v511
    %v513 = vand.u32 %v512, 4294901760
    %514 = vmatpush1.msra.mxu0 %v513
    %515 = vmatprep.subr.mxu0 0.0
    %v516 = vand.u32 %v50, 4294901760
    %v517 = vsub.f32 %v50, %v516
    %v518 = vand.u32 %v517, 4294901760
    %519 = vmatpush1.msra.mxu0 %v518
    %520 = vmatprep.subr.mxu0 0.0
    %v521 = vand.u32 %v49, 4294901760
    %v522 = vsub.f32 %v49, %v521
    %v523 = vand.u32 %v522, 4294901760
    %524 = vmatpush1.msra.mxu0 %v523
    %525 = vmatprep.subr.mxu0 0.0
    %v526 = vand.u32 %v48, 4294901760
    %v527 = vsub.f32 %v48, %v526
    %v528 = vand.u32 %v527, 4294901760
    %529 = vmatpush1.msra.mxu0 %v528
    %530 = vmatprep.subr.mxu0 0.0
    %v531 = vand.u32 %v47, 4294901760
    %v532 = vsub.f32 %v47, %v531
    %v533 = vand.u32 %v532, 4294901760
    %534 = vmatpush1.msra.mxu0 %v533
    %535 = vmatprep.subr.mxu0 0.0
    %v536 = vand.u32 %v46, 4294901760
    %v537 = vsub.f32 %v46, %v536
    %v538 = vand.u32 %v537, 4294901760
    %539 = vmatpush1.msra.mxu0 %v538
    %540 = vmatprep.subr.mxu0 0.0
    %v541 = vand.u32 %v45, 4294901760
    %v542 = vsub.f32 %v45, %v541
    %v543 = vand.u32 %v542, 4294901760
    %544 = vmatpush1.msra.mxu0 %v543
    %545 = vmatprep.subr.mxu0 0.0
    %v546 = vand.u32 %v44, 4294901760
    %v547 = vsub.f32 %v44, %v546
    %v548 = vand.u32 %v547, 4294901760
    %549 = vmatpush1.msra.mxu0 %v548
    %550 = vmatprep.subr.mxu0 0.0
    %v551 = vand.u32 %v43, 4294901760
    %v552 = vsub.f32 %v43, %v551
    %v553 = vand.u32 %v552, 4294901760
    %554 = vmatpush1.msra.mxu0 %v553
    %555 = vmatprep.subr.mxu0 0.0
    %v556 = vand.u32 %v42, 4294901760
    %v557 = vsub.f32 %v42, %v556
    %v558 = vand.u32 %v557, 4294901760
    %559 = vmatpush1.msra.mxu0 %v558
    %560 = vmatprep.subr.mxu0 0.0
    %v561 = vand.u32 %v41, 4294901760
    %v562 = vsub.f32 %v41, %v561
    %v563 = vand.u32 %v562, 4294901760
    %564 = vmatpush1.msra.mxu0 %v563
    %565 = vmatprep.subr.mxu0 0.0
    %v566 = vand.u32 %v40, 4294901760
    %v567 = vsub.f32 %v40, %v566
    %v568 = vand.u32 %v567, 4294901760
    %569 = vmatpush1.msra.mxu0 %v568
    %570 = vmatprep.subr.mxu0 0.0
    %v571 = vand.u32 %v39, 4294901760
    %v572 = vsub.f32 %v39, %v571
    %v573 = vand.u32 %v572, 4294901760
    %574 = vmatpush1.msra.mxu0 %v573
    %575 = vmatprep.subr.mxu0 0.0
    %576 = vmatpush2.msra.mxu0 0.0
    %577 = vmatprep.subr.mxu0 0.0
    %578 = vmatpush2.msra.mxu0 0.0
    %579 = vmatprep.subr.mxu0 0.0
    %580 = vmatpush2.msra.mxu0 0.0
    %581 = vmatprep.subr.mxu0 0.0
    %582 = vmatpush2.msra.mxu0 0.0
    %583 = vmatprep.subr.mxu0 0.0
    %584 = vmatpush2.msra.mxu0 0.0
    %585 = vmatprep.subr.mxu0 0.0
    %586 = vmatpush2.msra.mxu0 0.0
    %587 = vmatprep.subr.mxu0 0.0
    %588 = vmatpush2.msra.mxu0 0.0
    %589 = vmatprep.subr.mxu0 0.0
    %590 = vmatpush2.msra.mxu0 0.0
    %591 = vmatprep.subr.mxu0 0.0
    %592 = vmatpush2.msra.mxu0 0.0
    %593 = vmatprep.subr.mxu0 0.0
    %594 = vmatpush2.msra.mxu0 0.0
    %595 = vmatprep.subr.mxu0 0.0
    %596 = vmatpush2.msra.mxu0 0.0
    %597 = vmatprep.subr.mxu0 0.0
    %598 = vmatpush2.msra.mxu0 0.0
    %599 = vmatprep.subr.mxu0 0.0
    %600 = vmatpush2.msra.mxu0 0.0
    %601 = vmatprep.subr.mxu0 0.0
    %602 = vmatpush2.msra.mxu0 0.0
    %603 = vmatprep.subr.mxu0 0.0
    %604 = vmatpush2.msra.mxu0 0.0
    %605 = vmatprep.subr.mxu0 0.0
    %606 = vmatpush2.msra.mxu0 0.0
    %607 = vmatprep.mubr.f32.mxu0 0.0
    %v608 = vand.u32 %v38, 4294901760
    %609 = vmatmul.mubr.f32.gmra.mxu0 %v608
    %v610 = vpop.f32.mrf.mxu0
    %v611 = vadd.f32 %v492, %v610
    %v612 = vpop.f32.mrf.mxu0
    %613 = vdwg.mxu0
    %614 = vmatprep.subr.mxu0 0.0
    %v615 = vand.u32 %v54, 4294901760
    %616 = vmatpush1.msra.mxu0 %v615
    %617 = vmatprep.subr.mxu0 0.0
    %v618 = vand.u32 %v53, 4294901760
    %619 = vmatpush1.msra.mxu0 %v618
    %620 = vmatprep.subr.mxu0 0.0
    %v621 = vand.u32 %v52, 4294901760
    %622 = vmatpush1.msra.mxu0 %v621
    %623 = vmatprep.subr.mxu0 0.0
    %v624 = vand.u32 %v51, 4294901760
    %625 = vmatpush1.msra.mxu0 %v624
    %626 = vmatprep.subr.mxu0 0.0
    %v627 = vand.u32 %v50, 4294901760
    %628 = vmatpush1.msra.mxu0 %v627
    %629 = vmatprep.subr.mxu0 0.0
    %v630 = vand.u32 %v49, 4294901760
    %631 = vmatpush1.msra.mxu0 %v630
    %632 = vmatprep.subr.mxu0 0.0
    %v633 = vand.u32 %v48, 4294901760
    %634 = vmatpush1.msra.mxu0 %v633
    %635 = vmatprep.subr.mxu0 0.0
    %v636 = vand.u32 %v47, 4294901760
    %637 = vmatpush1.msra.mxu0 %v636
    %638 = vmatprep.subr.mxu0 0.0
    %v639 = vand.u32 %v46, 4294901760
    %640 = vmatpush1.msra.mxu0 %v639
    %641 = vmatprep.subr.mxu0 0.0
    %v642 = vand.u32 %v45, 4294901760
    %643 = vmatpush1.msra.mxu0 %v642
    %644 = vmatprep.subr.mxu0 0.0
    %v645 = vand.u32 %v44, 4294901760
    %646 = vmatpush1.msra.mxu0 %v645
    %647 = vmatprep.subr.mxu0 0.0
    %v648 = vand.u32 %v43, 4294901760
    %649 = vmatpush1.msra.mxu0 %v648
    %650 = vmatprep.subr.mxu0 0.0
    %v651 = vand.u32 %v42, 4294901760
    %652 = vmatpush1.msra.mxu0 %v651
    %653 = vmatprep.subr.mxu0 0.0
    %v654 = vand.u32 %v41, 4294901760
    %655 = vmatpush1.msra.mxu0 %v654
    %656 = vmatprep.subr.mxu0 0.0
    %v657 = vand.u32 %v40, 4294901760
    %658 = vmatpush1.msra.mxu0 %v657
    %659 = vmatprep.subr.mxu0 0.0
    %v660 = vand.u32 %v39, 4294901760
    %661 = vmatpush1.msra.mxu0 %v660
    %662 = vmatprep.subr.mxu0 0.0
    %663 = vmatpush2.msra.mxu0 0.0
    %664 = vmatprep.subr.mxu0 0.0
    %665 = vmatpush2.msra.mxu0 0.0
    %666 = vmatprep.subr.mxu0 0.0
    %667 = vmatpush2.msra.mxu0 0.0
    %668 = vmatprep.subr.mxu0 0.0
    %669 = vmatpush2.msra.mxu0 0.0
    %670 = vmatprep.subr.mxu0 0.0
    %671 = vmatpush2.msra.mxu0 0.0
    %672 = vmatprep.subr.mxu0 0.0
    %673 = vmatpush2.msra.mxu0 0.0
    %674 = vmatprep.subr.mxu0 0.0
    %675 = vmatpush2.msra.mxu0 0.0
    %676 = vmatprep.subr.mxu0 0.0
    %677 = vmatpush2.msra.mxu0 0.0
    %678 = vmatprep.subr.mxu0 0.0
    %679 = vmatpush2.msra.mxu0 0.0
    %680 = vmatprep.subr.mxu0 0.0
    %681 = vmatpush2.msra.mxu0 0.0
    %682 = vmatprep.subr.mxu0 0.0
    %683 = vmatpush2.msra.mxu0 0.0
    %684 = vmatprep.subr.mxu0 0.0
    %685 = vmatpush2.msra.mxu0 0.0
    %686 = vmatprep.subr.mxu0 0.0
    %687 = vmatpush2.msra.mxu0 0.0
    %688 = vmatprep.subr.mxu0 0.0
    %689 = vmatpush2.msra.mxu0 0.0
    %690 = vmatprep.subr.mxu0 0.0
    %691 = vmatpush2.msra.mxu0 0.0
    %692 = vmatprep.subr.mxu0 0.0
    %693 = vmatpush2.msra.mxu0 0.0
    %694 = vmatprep.mubr.f32.mxu0 0.0
    %v695 = vand.u32 %v38, 4294901760
    %696 = vmatmul.mubr.f32.gmra.mxu0 %v695
    %v697 = vpop.f32.mrf.mxu0
    %v698 = vadd.f32 %v611, %v697
    %v699 = vpop.f32.mrf.mxu0
    %700 = vdwg.mxu0
    %v701 = vtanh.pop %v698
    %s702 = scalar_lea.vmem [#allocation5], 136
    %v703 = vld [vmem:[%s702] sm:$0xff]
    %v704 = vld [vmem:[%s702 + $0x8] sm:$0xff]
    %v705 = vld [vmem:[%s702 + $0x10] sm:$0xff]
    %v706 = vld [vmem:[%s702 + $0x18] sm:$0xff]
    %v707 = vld [vmem:[%s702 + $0x20] sm:$0xff]
    %v708 = vld [vmem:[%s702 + $0x28] sm:$0xff]
    %v709 = vld [vmem:[%s702 + $0x30] sm:$0xff]
    %v710 = vld [vmem:[%s702 + $0x38] sm:$0xff]
    %v711 = vld [vmem:[%s702 + $0x40] sm:$0xff]
    %v712 = vld [vmem:[%s702 + $0x48] sm:$0xff]
    %v713 = vld [vmem:[%s702 + $0x50] sm:$0xff]
    %v714 = vld [vmem:[%s702 + $0x58] sm:$0xff]
    %v715 = vld [vmem:[%s702 + $0x60] sm:$0xff]
    %v716 = vld [vmem:[%s702 + $0x68] sm:$0xff]
    %v717 = vld [vmem:[%s702 + $0x70] sm:$0xff]
    %v718 = vld [vmem:[%s702 + $0x78] sm:$0xff]
    %v719 = vld [vmem:[%s702 + $0x80] sm:$0x1]
    %v720 = vlaneseq
    %v721 = vshrl.u32 %v720, 7
    %v722 = vsub.s32 0, %v721
    %v723 = vrot.slane %v719, %v722
    %724 = vmatprep.subr.mxu0 0.0
    %v725 = vand.u32 %v718, 4294901760
    %726 = vmatpush1.msra.mxu0 %v725
    %727 = vmatprep.subr.mxu0 0.0
    %v728 = vand.u32 %v717, 4294901760
    %729 = vmatpush1.msra.mxu0 %v728
    %730 = vmatprep.subr.mxu0 0.0
    %v731 = vand.u32 %v716, 4294901760
    %732 = vmatpush1.msra.mxu0 %v731
    %733 = vmatprep.subr.mxu0 0.0
    %v734 = vand.u32 %v715, 4294901760
    %735 = vmatpush1.msra.mxu0 %v734
    %736 = vmatprep.subr.mxu0 0.0
    %v737 = vand.u32 %v714, 4294901760
    %738 = vmatpush1.msra.mxu0 %v737
    %739 = vmatprep.subr.mxu0 0.0
    %v740 = vand.u32 %v713, 4294901760
    %741 = vmatpush1.msra.mxu0 %v740
    %742 = vmatprep.subr.mxu0 0.0
    %v743 = vand.u32 %v712, 4294901760
    %744 = vmatpush1.msra.mxu0 %v743
    %745 = vmatprep.subr.mxu0 0.0
    %v746 = vand.u32 %v711, 4294901760
    %747 = vmatpush1.msra.mxu0 %v746
    %748 = vmatprep.subr.mxu0 0.0
    %v749 = vand.u32 %v710, 4294901760
    %750 = vmatpush1.msra.mxu0 %v749
    %751 = vmatprep.subr.mxu0 0.0
    %v752 = vand.u32 %v709, 4294901760
    %753 = vmatpush1.msra.mxu0 %v752
    %754 = vmatprep.subr.mxu0 0.0
    %v755 = vand.u32 %v708, 4294901760
    %756 = vmatpush1.msra.mxu0 %v755
    %757 = vmatprep.subr.mxu0 0.0
    %v758 = vand.u32 %v707, 4294901760
    %759 = vmatpush1.msra.mxu0 %v758
    %760 = vmatprep.subr.mxu0 0.0
    %v761 = vand.u32 %v706, 4294901760
    %762 = vmatpush1.msra.mxu0 %v761
    %763 = vmatprep.subr.mxu0 0.0
    %v764 = vand.u32 %v705, 4294901760
    %765 = vmatpush1.msra.mxu0 %v764
    %766 = vmatprep.subr.mxu0 0.0
    %v767 = vand.u32 %v704, 4294901760
    %768 = vmatpush1.msra.mxu0 %v767
    %769 = vmatprep.subr.mxu0 0.0
    %v770 = vand.u32 %v703, 4294901760
    %771 = vmatpush1.msra.mxu0 %v770
    %772 = vmatprep.subr.mxu0 0.0
    %773 = vmatpush2.msra.mxu0 0.0
    %774 = vmatprep.subr.mxu0 0.0
    %775 = vmatpush2.msra.mxu0 0.0
    %776 = vmatprep.subr.mxu0 0.0
    %777 = vmatpush2.msra.mxu0 0.0
    %778 = vmatprep.subr.mxu0 0.0
    %779 = vmatpush2.msra.mxu0 0.0
    %780 = vmatprep.subr.mxu0 0.0
    %781 = vmatpush2.msra.mxu0 0.0
    %782 = vmatprep.subr.mxu0 0.0
    %783 = vmatpush2.msra.mxu0 0.0
    %784 = vmatprep.subr.mxu0 0.0
    %785 = vmatpush2.msra.mxu0 0.0
    %786 = vmatprep.subr.mxu0 0.0
    %787 = vmatpush2.msra.mxu0 0.0
    %788 = vmatprep.subr.mxu0 0.0
    %789 = vmatpush2.msra.mxu0 0.0
    %790 = vmatprep.subr.mxu0 0.0
    %791 = vmatpush2.msra.mxu0 0.0
    %792 = vmatprep.subr.mxu0 0.0
    %793 = vmatpush2.msra.mxu0 0.0
    %794 = vmatprep.subr.mxu0 0.0
    %795 = vmatpush2.msra.mxu0 0.0
    %796 = vmatprep.subr.mxu0 0.0
    %797 = vmatpush2.msra.mxu0 0.0
    %798 = vmatprep.subr.mxu0 0.0
    %799 = vmatpush2.msra.mxu0 0.0
    %800 = vmatprep.subr.mxu0 0.0
    %801 = vmatpush2.msra.mxu0 0.0
    %802 = vmatprep.subr.mxu0 0.0
    %803 = vmatpush2.msra.mxu0 0.0
    %804 = vmatprep.mubr.f32.mxu0 0.0
    %v805 = vand.u32 %v701, 4294901760
    %v806 = vsub.f32 %v701, %v805
    %v807 = vand.u32 %v806, 4294901760
    %v808 = vsub.f32 %v806, %v807
    %v809 = vand.u32 %v808, 4294901760
    %810 = vmatmul.mubr.f32.gmra.mxu0 %v809
    %v811 = vpop.f32.mrf.mxu0
    %v812 = vadd.f32 %v723, %v811
    %v813 = vpop.f32.mrf.mxu0
    %814 = vdwg.mxu0
    %815 = vmatprep.subr.mxu0 0.0
    %v816 = vand.u32 %v718, 4294901760
    %v817 = vsub.f32 %v718, %v816
    %v818 = vand.u32 %v817, 4294901760
    %v819 = vsub.f32 %v817, %v818
    %v820 = vand.u32 %v819, 4294901760
    %821 = vmatpush1.msra.mxu0 %v820
    %822 = vmatprep.subr.mxu0 0.0
    %v823 = vand.u32 %v717, 4294901760
    %v824 = vsub.f32 %v717, %v823
    %v825 = vand.u32 %v824, 4294901760
    %v826 = vsub.f32 %v824, %v825
    %v827 = vand.u32 %v826, 4294901760
    %828 = vmatpush1.msra.mxu0 %v827
    %829 = vmatprep.subr.mxu0 0.0
    %v830 = vand.u32 %v716, 4294901760
    %v831 = vsub.f32 %v716, %v830
    %v832 = vand.u32 %v831, 4294901760
    %v833 = vsub.f32 %v831, %v832
    %v834 = vand.u32 %v833, 4294901760
    %835 = vmatpush1.msra.mxu0 %v834
    %836 = vmatprep.subr.mxu0 0.0
    %v837 = vand.u32 %v715, 4294901760
    %v838 = vsub.f32 %v715, %v837
    %v839 = vand.u32 %v838, 4294901760
    %v840 = vsub.f32 %v838, %v839
    %v841 = vand.u32 %v840, 4294901760
    %842 = vmatpush1.msra.mxu0 %v841
    %843 = vmatprep.subr.mxu0 0.0
    %v844 = vand.u32 %v714, 4294901760
    %v845 = vsub.f32 %v714, %v844
    %v846 = vand.u32 %v845, 4294901760
    %v847 = vsub.f32 %v845, %v846
    %v848 = vand.u32 %v847, 4294901760
    %849 = vmatpush1.msra.mxu0 %v848
    %850 = vmatprep.subr.mxu0 0.0
    %v851 = vand.u32 %v713, 4294901760
    %v852 = vsub.f32 %v713, %v851
    %v853 = vand.u32 %v852, 4294901760
    %v854 = vsub.f32 %v852, %v853
    %v855 = vand.u32 %v854, 4294901760
    %856 = vmatpush1.msra.mxu0 %v855
    %857 = vmatprep.subr.mxu0 0.0
    %v858 = vand.u32 %v712, 4294901760
    %v859 = vsub.f32 %v712, %v858
    %v860 = vand.u32 %v859, 4294901760
    %v861 = vsub.f32 %v859, %v860
    %v862 = vand.u32 %v861, 4294901760
    %863 = vmatpush1.msra.mxu0 %v862
    %864 = vmatprep.subr.mxu0 0.0
    %v865 = vand.u32 %v711, 4294901760
    %v866 = vsub.f32 %v711, %v865
    %v867 = vand.u32 %v866, 4294901760
    %v868 = vsub.f32 %v866, %v867
    %v869 = vand.u32 %v868, 4294901760
    %870 = vmatpush1.msra.mxu0 %v869
    %871 = vmatprep.subr.mxu0 0.0
    %v872 = vand.u32 %v710, 4294901760
    %v873 = vsub.f32 %v710, %v872
    %v874 = vand.u32 %v873, 4294901760
    %v875 = vsub.f32 %v873, %v874
    %v876 = vand.u32 %v875, 4294901760
    %877 = vmatpush1.msra.mxu0 %v876
    %878 = vmatprep.subr.mxu0 0.0
    %v879 = vand.u32 %v709, 4294901760
    %v880 = vsub.f32 %v709, %v879
    %v881 = vand.u32 %v880, 4294901760
    %v882 = vsub.f32 %v880, %v881
    %v883 = vand.u32 %v882, 4294901760
    %884 = vmatpush1.msra.mxu0 %v883
    %885 = vmatprep.subr.mxu0 0.0
    %v886 = vand.u32 %v708, 4294901760
    %v887 = vsub.f32 %v708, %v886
    %v888 = vand.u32 %v887, 4294901760
    %v889 = vsub.f32 %v887, %v888
    %v890 = vand.u32 %v889, 4294901760
    %891 = vmatpush1.msra.mxu0 %v890
    %892 = vmatprep.subr.mxu0 0.0
    %v893 = vand.u32 %v707, 4294901760
    %v894 = vsub.f32 %v707, %v893
    %v895 = vand.u32 %v894, 4294901760
    %v896 = vsub.f32 %v894, %v895
    %v897 = vand.u32 %v896, 4294901760
    %898 = vmatpush1.msra.mxu0 %v897
    %899 = vmatprep.subr.mxu0 0.0
    %v900 = vand.u32 %v706, 4294901760
    %v901 = vsub.f32 %v706, %v900
    %v902 = vand.u32 %v901, 4294901760
    %v903 = vsub.f32 %v901, %v902
    %v904 = vand.u32 %v903, 4294901760
    %905 = vmatpush1.msra.mxu0 %v904
    %906 = vmatprep.subr.mxu0 0.0
    %v907 = vand.u32 %v705, 4294901760
    %v908 = vsub.f32 %v705, %v907
    %v909 = vand.u32 %v908, 4294901760
    %v910 = vsub.f32 %v908, %v909
    %v911 = vand.u32 %v910, 4294901760
    %912 = vmatpush1.msra.mxu0 %v911
    %913 = vmatprep.subr.mxu0 0.0
    %v914 = vand.u32 %v704, 4294901760
    %v915 = vsub.f32 %v704, %v914
    %v916 = vand.u32 %v915, 4294901760
    %v917 = vsub.f32 %v915, %v916
    %v918 = vand.u32 %v917, 4294901760
    %919 = vmatpush1.msra.mxu0 %v918
    %920 = vmatprep.subr.mxu0 0.0
    %v921 = vand.u32 %v703, 4294901760
    %v922 = vsub.f32 %v703, %v921
    %v923 = vand.u32 %v922, 4294901760
    %v924 = vsub.f32 %v922, %v923
    %v925 = vand.u32 %v924, 4294901760
    %926 = vmatpush1.msra.mxu0 %v925
    %927 = vmatprep.subr.mxu0 0.0
    %928 = vmatpush2.msra.mxu0 0.0
    %929 = vmatprep.subr.mxu0 0.0
    %930 = vmatpush2.msra.mxu0 0.0
    %931 = vmatprep.subr.mxu0 0.0
    %932 = vmatpush2.msra.mxu0 0.0
    %933 = vmatprep.subr.mxu0 0.0
    %934 = vmatpush2.msra.mxu0 0.0
    %935 = vmatprep.subr.mxu0 0.0
    %936 = vmatpush2.msra.mxu0 0.0
    %937 = vmatprep.subr.mxu0 0.0
    %938 = vmatpush2.msra.mxu0 0.0
    %939 = vmatprep.subr.mxu0 0.0
    %940 = vmatpush2.msra.mxu0 0.0
    %941 = vmatprep.subr.mxu0 0.0
    %942 = vmatpush2.msra.mxu0 0.0
    %943 = vmatprep.subr.mxu0 0.0
    %944 = vmatpush2.msra.mxu0 0.0
    %945 = vmatprep.subr.mxu0 0.0
    %946 = vmatpush2.msra.mxu0 0.0
    %947 = vmatprep.subr.mxu0 0.0
    %948 = vmatpush2.msra.mxu0 0.0
    %949 = vmatprep.subr.mxu0 0.0
    %950 = vmatpush2.msra.mxu0 0.0
    %951 = vmatprep.subr.mxu0 0.0
    %952 = vmatpush2.msra.mxu0 0.0
    %953 = vmatprep.subr.mxu0 0.0
    %954 = vmatpush2.msra.mxu0 0.0
    %955 = vmatprep.subr.mxu0 0.0
    %956 = vmatpush2.msra.mxu0 0.0
    %957 = vmatprep.subr.mxu0 0.0
    %958 = vmatpush2.msra.mxu0 0.0
    %959 = vmatprep.mubr.f32.mxu0 0.0
    %v960 = vand.u32 %v701, 4294901760
    %961 = vmatmul.mubr.f32.gmra.mxu0 %v960
    %v962 = vpop.f32.mrf.mxu0
    %v963 = vadd.f32 %v812, %v962
    %v964 = vpop.f32.mrf.mxu0
    %965 = vdwg.mxu0
    %966 = vmatprep.subr.mxu0 0.0
    %v967 = vand.u32 %v718, 4294901760
    %v968 = vsub.f32 %v718, %v967
    %969 = vmatpush1.msra.mxu0 %v968
    %970 = vmatprep.subr.mxu0 0.0
    %v971 = vand.u32 %v717, 4294901760
    %v972 = vsub.f32 %v717, %v971
    %973 = vmatpush1.msra.mxu0 %v972
    %974 = vmatprep.subr.mxu0 0.0
    %v975 = vand.u32 %v716, 4294901760
    %v976 = vsub.f32 %v716, %v975
    %977 = vmatpush1.msra.mxu0 %v976
    %978 = vmatprep.subr.mxu0 0.0
    %v979 = vand.u32 %v715, 4294901760
    %v980 = vsub.f32 %v715, %v979
    %981 = vmatpush1.msra.mxu0 %v980
    %982 = vmatprep.subr.mxu0 0.0
    %v983 = vand.u32 %v714, 4294901760
    %v984 = vsub.f32 %v714, %v983
    %985 = vmatpush1.msra.mxu0 %v984
    %986 = vmatprep.subr.mxu0 0.0
    %v987 = vand.u32 %v713, 4294901760
    %v988 = vsub.f32 %v713, %v987
    %989 = vmatpush1.msra.mxu0 %v988
    %990 = vmatprep.subr.mxu0 0.0
    %v991 = vand.u32 %v712, 4294901760
    %v992 = vsub.f32 %v712, %v991
    %993 = vmatpush1.msra.mxu0 %v992
    %994 = vmatprep.subr.mxu0 0.0
    %v995 = vand.u32 %v711, 4294901760
    %v996 = vsub.f32 %v711, %v995
    %997 = vmatpush1.msra.mxu0 %v996
    %998 = vmatprep.subr.mxu0 0.0
    %v999 = vand.u32 %v710, 4294901760
    %v1000 = vsub.f32 %v710, %v999
    %1001 = vmatpush1.msra.mxu0 %v1000
    %1002 = vmatprep.subr.mxu0 0.0
    %v1003 = vand.u32 %v709, 4294901760
    %v1004 = vsub.f32 %v709, %v1003
    %1005 = vmatpush1.msra.mxu0 %v1004
    %1006 = vmatprep.subr.mxu0 0.0
    %v1007 = vand.u32 %v708, 4294901760
    %v1008 = vsub.f32 %v708, %v1007
    %1009 = vmatpush1.msra.mxu0 %v1008
    %1010 = vmatprep.subr.mxu0 0.0
    %v1011 = vand.u32 %v707, 4294901760
    %v1012 = vsub.f32 %v707, %v1011
    %1013 = vmatpush1.msra.mxu0 %v1012
    %1014 = vmatprep.subr.mxu0 0.0
    %v1015 = vand.u32 %v706, 4294901760
    %v1016 = vsub.f32 %v706, %v1015
    %1017 = vmatpush1.msra.mxu0 %v1016
    %1018 = vmatprep.subr.mxu0 0.0
    %v1019 = vand.u32 %v705, 4294901760
    %v1020 = vsub.f32 %v705, %v1019
    %1021 = vmatpush1.msra.mxu0 %v1020
    %1022 = vmatprep.subr.mxu0 0.0
    %v1023 = vand.u32 %v704, 4294901760
    %v1024 = vsub.f32 %v704, %v1023
    %1025 = vmatpush1.msra.mxu0 %v1024
    %1026 = vmatprep.subr.mxu0 0.0
    %v1027 = vand.u32 %v703, 4294901760
    %v1028 = vsub.f32 %v703, %v1027
    %1029 = vmatpush1.msra.mxu0 %v1028
    %1030 = vmatprep.subr.mxu0 0.0
    %1031 = vmatpush2.msra.mxu0 0.0
    %1032 = vmatprep.subr.mxu0 0.0
    %1033 = vmatpush2.msra.mxu0 0.0
    %1034 = vmatprep.subr.mxu0 0.0
    %1035 = vmatpush2.msra.mxu0 0.0
    %1036 = vmatprep.subr.mxu0 0.0
    %1037 = vmatpush2.msra.mxu0 0.0
    %1038 = vmatprep.subr.mxu0 0.0
    %1039 = vmatpush2.msra.mxu0 0.0
    %1040 = vmatprep.subr.mxu0 0.0
    %1041 = vmatpush2.msra.mxu0 0.0
    %1042 = vmatprep.subr.mxu0 0.0
    %1043 = vmatpush2.msra.mxu0 0.0
    %1044 = vmatprep.subr.mxu0 0.0
    %1045 = vmatpush2.msra.mxu0 0.0
    %1046 = vmatprep.subr.mxu0 0.0
    %1047 = vmatpush2.msra.mxu0 0.0
    %1048 = vmatprep.subr.mxu0 0.0
    %1049 = vmatpush2.msra.mxu0 0.0
    %1050 = vmatprep.subr.mxu0 0.0
    %1051 = vmatpush2.msra.mxu0 0.0
    %1052 = vmatprep.subr.mxu0 0.0
    %1053 = vmatpush2.msra.mxu0 0.0
    %1054 = vmatprep.subr.mxu0 0.0
    %1055 = vmatpush2.msra.mxu0 0.0
    %1056 = vmatprep.subr.mxu0 0.0
    %1057 = vmatpush2.msra.mxu0 0.0
    %1058 = vmatprep.subr.mxu0 0.0
    %1059 = vmatpush2.msra.mxu0 0.0
    %1060 = vmatprep.subr.mxu0 0.0
    %1061 = vmatpush2.msra.mxu0 0.0
    %1062 = vmatprep.mubr.f32.mxu0 0.0
    %v1063 = vand.u32 %v701, 4294901760
    %v1064 = vsub.f32 %v701, %v1063
    %1065 = vmatmul.mubr.f32.gmra.mxu0 %v1064
    %v1066 = vpop.f32.mrf.mxu0
    %v1067 = vadd.f32 %v963, %v1066
    %v1068 = vpop.f32.mrf.mxu0
    %1069 = vdwg.mxu0
    %1070 = vmatprep.subr.mxu0 0.0
    %v1071 = vand.u32 %v718, 4294901760
    %1072 = vmatpush1.msra.mxu0 %v1071
    %1073 = vmatprep.subr.mxu0 0.0
    %v1074 = vand.u32 %v717, 4294901760
    %1075 = vmatpush1.msra.mxu0 %v1074
    %1076 = vmatprep.subr.mxu0 0.0
    %v1077 = vand.u32 %v716, 4294901760
    %1078 = vmatpush1.msra.mxu0 %v1077
    %1079 = vmatprep.subr.mxu0 0.0
    %v1080 = vand.u32 %v715, 4294901760
    %1081 = vmatpush1.msra.mxu0 %v1080
    %1082 = vmatprep.subr.mxu0 0.0
    %v1083 = vand.u32 %v714, 4294901760
    %1084 = vmatpush1.msra.mxu0 %v1083
    %1085 = vmatprep.subr.mxu0 0.0
    %v1086 = vand.u32 %v713, 4294901760
    %1087 = vmatpush1.msra.mxu0 %v1086
    %1088 = vmatprep.subr.mxu0 0.0
    %v1089 = vand.u32 %v712, 4294901760
    %1090 = vmatpush1.msra.mxu0 %v1089
    %1091 = vmatprep.subr.mxu0 0.0
    %v1092 = vand.u32 %v711, 4294901760
    %1093 = vmatpush1.msra.mxu0 %v1092
    %1094 = vmatprep.subr.mxu0 0.0
    %v1095 = vand.u32 %v710, 4294901760
    %1096 = vmatpush1.msra.mxu0 %v1095
    %1097 = vmatprep.subr.mxu0 0.0
    %v1098 = vand.u32 %v709, 4294901760
    %1099 = vmatpush1.msra.mxu0 %v1098
    %1100 = vmatprep.subr.mxu0 0.0
    %v1101 = vand.u32 %v708, 4294901760
    %1102 = vmatpush1.msra.mxu0 %v1101
    %1103 = vmatprep.subr.mxu0 0.0
    %v1104 = vand.u32 %v707, 4294901760
    %1105 = vmatpush1.msra.mxu0 %v1104
    %1106 = vmatprep.subr.mxu0 0.0
    %v1107 = vand.u32 %v706, 4294901760
    %1108 = vmatpush1.msra.mxu0 %v1107
    %1109 = vmatprep.subr.mxu0 0.0
    %v1110 = vand.u32 %v705, 4294901760
    %1111 = vmatpush1.msra.mxu0 %v1110
    %1112 = vmatprep.subr.mxu0 0.0
    %v1113 = vand.u32 %v704, 4294901760
    %1114 = vmatpush1.msra.mxu0 %v1113
    %1115 = vmatprep.subr.mxu0 0.0
    %v1116 = vand.u32 %v703, 4294901760
    %1117 = vmatpush1.msra.mxu0 %v1116
    %1118 = vmatprep.subr.mxu0 0.0
    %1119 = vmatpush2.msra.mxu0 0.0
    %1120 = vmatprep.subr.mxu0 0.0
    %1121 = vmatpush2.msra.mxu0 0.0
    %1122 = vmatprep.subr.mxu0 0.0
    %1123 = vmatpush2.msra.mxu0 0.0
    %1124 = vmatprep.subr.mxu0 0.0
    %1125 = vmatpush2.msra.mxu0 0.0
    %1126 = vmatprep.subr.mxu0 0.0
    %1127 = vmatpush2.msra.mxu0 0.0
    %1128 = vmatprep.subr.mxu0 0.0
    %1129 = vmatpush2.msra.mxu0 0.0
    %1130 = vmatprep.subr.mxu0 0.0
    %1131 = vmatpush2.msra.mxu0 0.0
    %1132 = vmatprep.subr.mxu0 0.0
    %1133 = vmatpush2.msra.mxu0 0.0
    %1134 = vmatprep.subr.mxu0 0.0
    %1135 = vmatpush2.msra.mxu0 0.0
    %1136 = vmatprep.subr.mxu0 0.0
    %1137 = vmatpush2.msra.mxu0 0.0
    %1138 = vmatprep.subr.mxu0 0.0
    %1139 = vmatpush2.msra.mxu0 0.0
    %1140 = vmatprep.subr.mxu0 0.0
    %1141 = vmatpush2.msra.mxu0 0.0
    %1142 = vmatprep.subr.mxu0 0.0
    %1143 = vmatpush2.msra.mxu0 0.0
    %1144 = vmatprep.subr.mxu0 0.0
    %1145 = vmatpush2.msra.mxu0 0.0
    %1146 = vmatprep.subr.mxu0 0.0
    %1147 = vmatpush2.msra.mxu0 0.0
    %1148 = vmatprep.subr.mxu0 0.0
    %1149 = vmatpush2.msra.mxu0 0.0
    %1150 = vmatprep.mubr.f32.mxu0 0.0
    %v1151 = vand.u32 %v701, 4294901760
    %v1152 = vsub.f32 %v701, %v1151
    %v1153 = vand.u32 %v1152, 4294901760
    %1154 = vmatmul.mubr.f32.gmra.mxu0 %v1153
    %v1155 = vpop.f32.mrf.mxu0
    %v1156 = vadd.f32 %v1067, %v1155
    %v1157 = vpop.f32.mrf.mxu0
    %1158 = vdwg.mxu0
    %1159 = vmatprep.subr.mxu0 0.0
    %v1160 = vand.u32 %v718, 4294901760
    %v1161 = vsub.f32 %v718, %v1160
    %v1162 = vand.u32 %v1161, 4294901760
    %1163 = vmatpush1.msra.mxu0 %v1162
    %1164 = vmatprep.subr.mxu0 0.0
    %v1165 = vand.u32 %v717, 4294901760
    %v1166 = vsub.f32 %v717, %v1165
    %v1167 = vand.u32 %v1166, 4294901760
    %1168 = vmatpush1.msra.mxu0 %v1167
    %1169 = vmatprep.subr.mxu0 0.0
    %v1170 = vand.u32 %v716, 4294901760
    %v1171 = vsub.f32 %v716, %v1170
    %v1172 = vand.u32 %v1171, 4294901760
    %1173 = vmatpush1.msra.mxu0 %v1172
    %1174 = vmatprep.subr.mxu0 0.0
    %v1175 = vand.u32 %v715, 4294901760
    %v1176 = vsub.f32 %v715, %v1175
    %v1177 = vand.u32 %v1176, 4294901760
    %1178 = vmatpush1.msra.mxu0 %v1177
    %1179 = vmatprep.subr.mxu0 0.0
    %v1180 = vand.u32 %v714, 4294901760
    %v1181 = vsub.f32 %v714, %v1180
    %v1182 = vand.u32 %v1181, 4294901760
    %1183 = vmatpush1.msra.mxu0 %v1182
    %1184 = vmatprep.subr.mxu0 0.0
    %v1185 = vand.u32 %v713, 4294901760
    %v1186 = vsub.f32 %v713, %v1185
    %v1187 = vand.u32 %v1186, 4294901760
    %1188 = vmatpush1.msra.mxu0 %v1187
    %1189 = vmatprep.subr.mxu0 0.0
    %v1190 = vand.u32 %v712, 4294901760
    %v1191 = vsub.f32 %v712, %v1190
    %v1192 = vand.u32 %v1191, 4294901760
    %1193 = vmatpush1.msra.mxu0 %v1192
    %1194 = vmatprep.subr.mxu0 0.0
    %v1195 = vand.u32 %v711, 4294901760
    %v1196 = vsub.f32 %v711, %v1195
    %v1197 = vand.u32 %v1196, 4294901760
    %1198 = vmatpush1.msra.mxu0 %v1197
    %1199 = vmatprep.subr.mxu0 0.0
    %v1200 = vand.u32 %v710, 4294901760
    %v1201 = vsub.f32 %v710, %v1200
    %v1202 = vand.u32 %v1201, 4294901760
    %1203 = vmatpush1.msra.mxu0 %v1202
    %1204 = vmatprep.subr.mxu0 0.0
    %v1205 = vand.u32 %v709, 4294901760
    %v1206 = vsub.f32 %v709, %v1205
    %v1207 = vand.u32 %v1206, 4294901760
    %1208 = vmatpush1.msra.mxu0 %v1207
    %1209 = vmatprep.subr.mxu0 0.0
    %v1210 = vand.u32 %v708, 4294901760
    %v1211 = vsub.f32 %v708, %v1210
    %v1212 = vand.u32 %v1211, 4294901760
    %1213 = vmatpush1.msra.mxu0 %v1212
    %1214 = vmatprep.subr.mxu0 0.0
    %v1215 = vand.u32 %v707, 4294901760
    %v1216 = vsub.f32 %v707, %v1215
    %v1217 = vand.u32 %v1216, 4294901760
    %1218 = vmatpush1.msra.mxu0 %v1217
    %1219 = vmatprep.subr.mxu0 0.0
    %v1220 = vand.u32 %v706, 4294901760
    %v1221 = vsub.f32 %v706, %v1220
    %v1222 = vand.u32 %v1221, 4294901760
    %1223 = vmatpush1.msra.mxu0 %v1222
    %1224 = vmatprep.subr.mxu0 0.0
    %v1225 = vand.u32 %v705, 4294901760
    %v1226 = vsub.f32 %v705, %v1225
    %v1227 = vand.u32 %v1226, 4294901760
    %1228 = vmatpush1.msra.mxu0 %v1227
    %1229 = vmatprep.subr.mxu0 0.0
    %v1230 = vand.u32 %v704, 4294901760
    %v1231 = vsub.f32 %v704, %v1230
    %v1232 = vand.u32 %v1231, 4294901760
    %1233 = vmatpush1.msra.mxu0 %v1232
    %1234 = vmatprep.subr.mxu0 0.0
    %v1235 = vand.u32 %v703, 4294901760
    %v1236 = vsub.f32 %v703, %v1235
    %v1237 = vand.u32 %v1236, 4294901760
    %1238 = vmatpush1.msra.mxu0 %v1237
    %1239 = vmatprep.subr.mxu0 0.0
    %1240 = vmatpush2.msra.mxu0 0.0
    %1241 = vmatprep.subr.mxu0 0.0
    %1242 = vmatpush2.msra.mxu0 0.0
    %1243 = vmatprep.subr.mxu0 0.0
    %1244 = vmatpush2.msra.mxu0 0.0
    %1245 = vmatprep.subr.mxu0 0.0
    %1246 = vmatpush2.msra.mxu0 0.0
    %1247 = vmatprep.subr.mxu0 0.0
    %1248 = vmatpush2.msra.mxu0 0.0
    %1249 = vmatprep.subr.mxu0 0.0
    %1250 = vmatpush2.msra.mxu0 0.0
    %1251 = vmatprep.subr.mxu0 0.0
    %1252 = vmatpush2.msra.mxu0 0.0
    %1253 = vmatprep.subr.mxu0 0.0
    %1254 = vmatpush2.msra.mxu0 0.0
    %1255 = vmatprep.subr.mxu0 0.0
    %1256 = vmatpush2.msra.mxu0 0.0
    %1257 = vmatprep.subr.mxu0 0.0
    %1258 = vmatpush2.msra.mxu0 0.0
    %1259 = vmatprep.subr.mxu0 0.0
    %1260 = vmatpush2.msra.mxu0 0.0
    %1261 = vmatprep.subr.mxu0 0.0
    %1262 = vmatpush2.msra.mxu0 0.0
    %1263 = vmatprep.subr.mxu0 0.0
    %1264 = vmatpush2.msra.mxu0 0.0
    %1265 = vmatprep.subr.mxu0 0.0
    %1266 = vmatpush2.msra.mxu0 0.0
    %1267 = vmatprep.subr.mxu0 0.0
    %1268 = vmatpush2.msra.mxu0 0.0
    %1269 = vmatprep.subr.mxu0 0.0
    %1270 = vmatpush2.msra.mxu0 0.0
    %1271 = vmatprep.mubr.f32.mxu0 0.0
    %v1272 = vand.u32 %v701, 4294901760
    %1273 = vmatmul.mubr.f32.gmra.mxu0 %v1272
    %v1274 = vpop.f32.mrf.mxu0
    %v1275 = vadd.f32 %v1156, %v1274
    %v1276 = vpop.f32.mrf.mxu0
    %1277 = vdwg.mxu0
    %1278 = vmatprep.subr.mxu0 0.0
    %v1279 = vand.u32 %v718, 4294901760
    %1280 = vmatpush1.msra.mxu0 %v1279
    %1281 = vmatprep.subr.mxu0 0.0
    %v1282 = vand.u32 %v717, 4294901760
    %1283 = vmatpush1.msra.mxu0 %v1282
    %1284 = vmatprep.subr.mxu0 0.0
    %v1285 = vand.u32 %v716, 4294901760
    %1286 = vmatpush1.msra.mxu0 %v1285
    %1287 = vmatprep.subr.mxu0 0.0
    %v1288 = vand.u32 %v715, 4294901760
    %1289 = vmatpush1.msra.mxu0 %v1288
    %1290 = vmatprep.subr.mxu0 0.0
    %v1291 = vand.u32 %v714, 4294901760
    %1292 = vmatpush1.msra.mxu0 %v1291
    %1293 = vmatprep.subr.mxu0 0.0
    %v1294 = vand.u32 %v713, 4294901760
    %1295 = vmatpush1.msra.mxu0 %v1294
    %1296 = vmatprep.subr.mxu0 0.0
    %v1297 = vand.u32 %v712, 4294901760
    %1298 = vmatpush1.msra.mxu0 %v1297
    %1299 = vmatprep.subr.mxu0 0.0
    %v1300 = vand.u32 %v711, 4294901760
    %1301 = vmatpush1.msra.mxu0 %v1300
    %1302 = vmatprep.subr.mxu0 0.0
    %v1303 = vand.u32 %v710, 4294901760
    %1304 = vmatpush1.msra.mxu0 %v1303
    %1305 = vmatprep.subr.mxu0 0.0
    %v1306 = vand.u32 %v709, 4294901760
    %1307 = vmatpush1.msra.mxu0 %v1306
    %1308 = vmatprep.subr.mxu0 0.0
    %v1309 = vand.u32 %v708, 4294901760
    %1310 = vmatpush1.msra.mxu0 %v1309
    %1311 = vmatprep.subr.mxu0 0.0
    %v1312 = vand.u32 %v707, 4294901760
    %1313 = vmatpush1.msra.mxu0 %v1312
    %1314 = vmatprep.subr.mxu0 0.0
    %v1315 = vand.u32 %v706, 4294901760
    %1316 = vmatpush1.msra.mxu0 %v1315
    %1317 = vmatprep.subr.mxu0 0.0
    %v1318 = vand.u32 %v705, 4294901760
    %1319 = vmatpush1.msra.mxu0 %v1318
    %1320 = vmatprep.subr.mxu0 0.0
    %v1321 = vand.u32 %v704, 4294901760
    %1322 = vmatpush1.msra.mxu0 %v1321
    %1323 = vmatprep.subr.mxu0 0.0
    %v1324 = vand.u32 %v703, 4294901760
    %1325 = vmatpush1.msra.mxu0 %v1324
    %1326 = vmatprep.subr.mxu0 0.0
    %1327 = vmatpush2.msra.mxu0 0.0
    %1328 = vmatprep.subr.mxu0 0.0
    %1329 = vmatpush2.msra.mxu0 0.0
    %1330 = vmatprep.subr.mxu0 0.0
    %1331 = vmatpush2.msra.mxu0 0.0
    %1332 = vmatprep.subr.mxu0 0.0
    %1333 = vmatpush2.msra.mxu0 0.0
    %1334 = vmatprep.subr.mxu0 0.0
    %1335 = vmatpush2.msra.mxu0 0.0
    %1336 = vmatprep.subr.mxu0 0.0
    %1337 = vmatpush2.msra.mxu0 0.0
    %1338 = vmatprep.subr.mxu0 0.0
    %1339 = vmatpush2.msra.mxu0 0.0
    %1340 = vmatprep.subr.mxu0 0.0
    %1341 = vmatpush2.msra.mxu0 0.0
    %1342 = vmatprep.subr.mxu0 0.0
    %1343 = vmatpush2.msra.mxu0 0.0
    %1344 = vmatprep.subr.mxu0 0.0
    %1345 = vmatpush2.msra.mxu0 0.0
    %1346 = vmatprep.subr.mxu0 0.0
    %1347 = vmatpush2.msra.mxu0 0.0
    %1348 = vmatprep.subr.mxu0 0.0
    %1349 = vmatpush2.msra.mxu0 0.0
    %1350 = vmatprep.subr.mxu0 0.0
    %1351 = vmatpush2.msra.mxu0 0.0
    %1352 = vmatprep.subr.mxu0 0.0
    %1353 = vmatpush2.msra.mxu0 0.0
    %1354 = vmatprep.subr.mxu0 0.0
    %1355 = vmatpush2.msra.mxu0 0.0
    %1356 = vmatprep.subr.mxu0 0.0
    %1357 = vmatpush2.msra.mxu0 0.0
    %1358 = vmatprep.mubr.f32.mxu0 0.0
    %v1359 = vand.u32 %v701, 4294901760
    %1360 = vmatmul.mubr.f32.gmra.mxu0 %v1359
    %v1361 = vpop.f32.mrf.mxu0
    %v1362 = vadd.f32 %v1275, %v1361
    %v1363 = vpop.f32.mrf.mxu0
    %1364 = vdwg.mxu0
    %v1365 = vtanh.pop %v1362
    %1366 = vst [vmem:[#allocation7] sm:$0xff] %v1365
    // Predicated region
    $region18: #{tpu_custom_call.1} parent=1 // pred_check
      _
    $region19: #{tpu_custom_call.1} parent=1 // pred_check_branch
      %1368 = sbr.rel (0) target = $region21
    $region20: #{tpu_custom_call.1} parent=1 // pred_region
      %s1370 = ssub.s32 128, 128
      %1371 = vsyncadd [#allocation4], %s1370
      %s1373 = sshll.u32 [#allocation7], 4
      %s1374 = int_to_ptr.vmem [resolvable:$true] %s1373
      %1376 = dma.vmem_to_hbm [thread:$0]  %s1374, 128, %s2, [#allocation4]
    $region21: #{tpu_custom_call.1} parent=1 // pred_fallthru
      _
    // Predicated region
    $region22: #{tpu_custom_call.1} parent=1 // pred_check
      _
    $region23: #{tpu_custom_call.1} parent=1 // pred_check_branch
      %1378 = sbr.rel (0) target = $region25
    $region24: #{tpu_custom_call.1} parent=1 // pred_region
      %1379 = dma.done [#allocation4], 128
    $region25: #{tpu_custom_call.1} parent=1 // pred_fallthru
      _
    %1380 = vsyncpa [#allocation3], 1
    %1381 = vsyncpa [#allocation6], 1
    %1382 = vsyncpa [#allocation4], 1

</llo_original>
